<compile_context>
chip_gen: v5e
topology: v5e:2x2
jax: 0.10.0
libtpu: 0.0.40
codegen_flags: <defaults>
</compile_context>

<pallas_src>
import functools

import jax
import jax.numpy as jnp
from jax.experimental import pallas as pl
from jax.experimental.pallas import tpu as pltpu


def xception_kernel(x_ref, w1t_ref, b1_ref, w2_ref, b2_ref, o_ref, hbuf_ref,
                    *, kh, kw, W, P):
    # x_ref  : (Cin,  P)        P = N*H*W (lanes)
    # w1t_ref: (Cout, Cin)      pointwise weight, transposed
    # b1_ref : (Cout, 1)
    # w2_ref : (Cout, kh*kw)    depthwise weight, one column per tap
    # b2_ref : (Cout, 1)
    # o_ref  : (Cout, P)        depthwise result at every input-aligned position
    # hbuf_ref: (Cout, P + PAD) VMEM scratch (zero tail) for shifted tap reads
    Cout = o_ref.shape[0]
    PAD = hbuf_ref.shape[1] - P

    # --- pointwise 1x1 conv: (Cout,Cin) @ (Cin,P) -> (Cout,P), lane dim = P ---
    h = jnp.dot(w1t_ref[...], x_ref[...],
                preferred_element_type=jnp.float32) + b1_ref[...]

    # Stage h in a tail-padded scratch so every depthwise tap is a plain load
    # at a static lane offset (values past P are cropped by the wrapper).
    hbuf_ref[:, :P] = h
    hbuf_ref[:, P:] = jnp.zeros((Cout, PAD), jnp.float32)

    # --- depthwise kh x kw conv (groups == channels), shift-and-FMA on VPU ---
    w2 = w2_ref[...]                       # hoisted single load, (Cout, kh*kw)
    acc = h * w2[:, 0:1]                   # tap (0, 0): shift 0
    for t in range(1, kh * kw):
        ky, kx = divmod(t, kw)
        s = ky * W + kx                    # static lane shift for this tap
        acc = acc + hbuf_ref[:, s:s + P] * w2[:, t:t + 1]

    o_ref[...] = (acc + b2_ref[...]).astype(o_ref.dtype)


def xception_forward(x_nchw, w1, b1, w2, b2, *, kernel_size, stride):
    """w1: (Cin, Cout), b1: (1, Cout), w2: (kh, kw, Cout), b2: (1, Cout)."""
    N, Cin, H, W = x_nchw.shape
    Cout = w1.shape[1]
    kh = kw = kernel_size
    Ho = (H - kh) // stride + 1
    Wo = (W - kw) // stride + 1
    P = N * H * W
    PAD = (kh - 1) * W + (kw - 1)          # max tap shift

    # Lane-dense operand layouts.
    x_flat = jnp.transpose(x_nchw, (1, 0, 2, 3)).reshape(Cin, P)   # (Cin, N*H*W)
    w1t = jnp.transpose(w1)                                        # (Cout, Cin)
    b1c = b1.reshape(Cout, 1)
    w2c = jnp.transpose(w2.reshape(kh * kw, Cout))                 # (Cout, kh*kw)
    b2c = b2.reshape(Cout, 1)

    flops = 2 * Cout * Cin * P + 2 * Cout * kh * kw * P
    bytes_accessed = 4 * (Cin * P + Cout * Cin + Cout + Cout * kh * kw
                          + Cout + Cout * P)

    kern = functools.partial(xception_kernel, kh=kh, kw=kw, W=W, P=P)
    acc_flat = pl.pallas_call(
        kern,
        out_shape=jax.ShapeDtypeStruct((Cout, P), x_nchw.dtype),
        grid=(1,),
        in_specs=[
            pl.BlockSpec((Cin, P), lambda i: (0, 0)),
            pl.BlockSpec((Cout, Cin), lambda i: (0, 0)),
            pl.BlockSpec((Cout, 1), lambda i: (0, 0)),
            pl.BlockSpec((Cout, kh * kw), lambda i: (0, 0)),
            pl.BlockSpec((Cout, 1), lambda i: (0, 0)),
        ],
        out_specs=pl.BlockSpec((Cout, P), lambda i: (0, 0)),
        scratch_shapes=[pltpu.VMEM((Cout, P + PAD), jnp.float32)],
        compiler_params=pltpu.CompilerParams(
            dimension_semantics=("arbitrary",)),
        cost_estimate=pl.CostEstimate(flops=flops, transcendentals=0,
                                      bytes_accessed=bytes_accessed),
    )(x_flat, w1t, b1c, w2c, b2c)

    # VALID / stride crop + back to NCHW (tiny: Cout*N*Ho*Wo elements).
    acc = acc_flat.reshape(Cout, N, H, W)
    out = acc[:, :, 0:(Ho - 1) * stride + 1:stride,
                    0:(Wo - 1) * stride + 1:stride]            # (Cout,N,Ho,Wo)
    return jnp.transpose(out, (1, 0, 2, 3))                    # (N,Cout,Ho,Wo)


def reference_forward(x, w1, b1, w2, b2, *, stride):
    """Pure-JAX reference matching the PyTorch module (NCHW)."""
    wp = jnp.transpose(w1)[:, :, None, None]                   # (Cout, Cin, 1, 1)
    h = jax.lax.conv_general_dilated(
        x, wp, (1, 1), "VALID", dimension_numbers=("NCHW", "OIHW", "NCHW"))
    h = h + b1.reshape(1, -1, 1, 1)
    wd = jnp.transpose(w2, (2, 0, 1))[:, None, :, :]           # (Cout, 1, kh, kw)
    o = jax.lax.conv_general_dilated(
        h, wd, (stride, stride), "VALID",
        dimension_numbers=("NCHW", "OIHW", "NCHW"),
        feature_group_count=h.shape[1])
    return o + b2.reshape(1, -1, 1, 1)


if __name__ == "__main__":
    # Module config: i_dim=(4, 16, 16), out_channels=8, kernel_size=3, stride=1,
    # transpose=False  (pointwise-first depthwise-separable conv).
    N, Cin, H, W = 2, 4, 16, 16
    Cout, K, S = 8, 3, 1

    key = jax.random.PRNGKey(0)
    kx, k1, kb1, k2, kb2 = jax.random.split(key, 5)
    x = jax.random.normal(kx, (N, Cin, H, W), jnp.float32)
    w1 = jax.random.normal(k1, (Cin, Cout), jnp.float32) * 0.1    # pointwise weight
    b1 = jax.random.normal(kb1, (1, Cout), jnp.float32) * 0.1     # pointwise bias
    w2 = jax.random.normal(k2, (K, K, Cout), jnp.float32) * 0.1   # depthwise weight
    b2 = jax.random.normal(kb2, (1, Cout), jnp.float32) * 0.1     # depthwise bias

    out = xception_forward(x, w1, b1, w2, b2, kernel_size=K, stride=S)
    out = jax.block_until_ready(out)

    ref = reference_forward(x, w1, b1, w2, b2, stride=S)
    assert out.shape == (N, Cout, (H - K) // S + 1, (W - K) // S + 1), out.shape
    assert jnp.allclose(out, ref, atol=1e-4, rtol=1e-4), float(
        jnp.max(jnp.abs(out - ref)))

    print("KERNEL_OK")
</pallas_src>

<mosaic_0001>
module attributes {stable_mosaic.version = 11 : i64} {
  func.func @xception_kernel(%arg0: i32, %arg1: memref<4x512xf32, #tpu.memory_space<vmem>>, %arg2: memref<8x4xf32, #tpu.memory_space<vmem>>, %arg3: memref<8x1xf32, #tpu.memory_space<vmem>>, %arg4: memref<8x9xf32, #tpu.memory_space<vmem>>, %arg5: memref<8x1xf32, #tpu.memory_space<vmem>>, %arg6: memref<8x512xf32, #tpu.memory_space<vmem>>, %arg7: memref<8x546xf32, #tpu.memory_space<vmem>>) attributes {dimension_semantics = [#tpu.dimension_semantics<arbitrary>], iteration_bounds = array<i64: 1>, scalar_prefetch = 0 : i64, scratch_operands = 1 : i64, tpu.core_type = #tpu.core_type<tc>, window_params = [{pipeline_mode = #tpu.pipeline_mode<synchronous>, transform_indices = @transform_0, window_bounds = array<i64: 4, 512>}, {pipeline_mode = #tpu.pipeline_mode<synchronous>, transform_indices = @transform_1, window_bounds = array<i64: 8, 4>}, {pipeline_mode = #tpu.pipeline_mode<synchronous>, transform_indices = @transform_2, window_bounds = array<i64: 8, 1>}, {pipeline_mode = #tpu.pipeline_mode<synchronous>, transform_indices = @transform_3, window_bounds = array<i64: 8, 9>}, {pipeline_mode = #tpu.pipeline_mode<synchronous>, transform_indices = @transform_4, window_bounds = array<i64: 8, 1>}, {pipeline_mode = #tpu.pipeline_mode<synchronous>, transform_indices = @transform_5, window_bounds = array<i64: 8, 512>}]} {
    %c0 = arith.constant 0 : index
    %c0_0 = arith.constant 0 : index
    %0 = vector.load %arg2[%c0, %c0_0] : memref<8x4xf32, #tpu.memory_space<vmem>>, vector<8x4xf32>
    %c0_1 = arith.constant 0 : index
    %c0_2 = arith.constant 0 : index
    %1 = vector.load %arg1[%c0_1, %c0_2] : memref<4x512xf32, #tpu.memory_space<vmem>>, vector<4x512xf32>
    %cst = arith.constant dense<0.000000e+00> : vector<8x512xf32>
    %2 = tpu.matmul %0, %1, %cst {dimension_numbers = #tpu.dot_dimension_numbers<[1], [0], [0], [1], [0, 0, 1, 1], [], []>} : vector<8x4xf32>, vector<4x512xf32>, vector<8x512xf32> -> vector<8x512xf32>
    %c0_3 = arith.constant 0 : index
    %c0_4 = arith.constant 0 : index
    %3 = vector.load %arg3[%c0_3, %c0_4] : memref<8x1xf32, #tpu.memory_space<vmem>>, vector<8x1xf32>
    %4 = vector.broadcast %3 : vector<8x1xf32> to vector<8x512xf32>
    %5 = arith.addf %2, %4 : vector<8x512xf32>
    %c0_5 = arith.constant 0 : index
    %c0_6 = arith.constant 0 : index
    %6 = vector.load %arg7[%c0_5, %c0_6] : memref<8x546xf32, #tpu.memory_space<vmem>>, vector<8x512xf32>
    tpu.vector_store %arg7[%c0_5, %c0_6], %5 {strides = array<i32>} : memref<8x546xf32, #tpu.memory_space<vmem>>, vector<8x512xf32>,
    %cst_7 = arith.constant 0.000000e+00 : f32
    %7 = vector.broadcast %cst_7 : f32 to vector<8x34xf32>
    %c0_8 = arith.constant 0 : index
    %c512 = arith.constant 512 : index
    %8 = vector.load %arg7[%c0_8, %c512] : memref<8x546xf32, #tpu.memory_space<vmem>>, vector<8x34xf32>
    tpu.vector_store %arg7[%c0_8, %c512], %7 {strides = array<i32>} : memref<8x546xf32, #tpu.memory_space<vmem>>, vector<8x34xf32>,
    %c0_9 = arith.constant 0 : index
    %c0_10 = arith.constant 0 : index
    %9 = vector.load %arg4[%c0_9, %c0_10] : memref<8x9xf32, #tpu.memory_space<vmem>>, vector<8x9xf32>
    %10 = vector.extract_strided_slice %9 {offsets = [0, 0], sizes = [8, 1], strides = [1, 1]} : vector<8x9xf32> to vector<8x1xf32>
    %11 = vector.broadcast %10 : vector<8x1xf32> to vector<8x512xf32>
    %12 = arith.mulf %5, %11 : vector<8x512xf32>
    %c0_11 = arith.constant 0 : index
    %c1 = arith.constant 1 : index
    %13 = vector.load %arg7[%c0_11, %c1] : memref<8x546xf32, #tpu.memory_space<vmem>>, vector<8x512xf32>
    %14 = vector.extract_strided_slice %9 {offsets = [0, 1], sizes = [8, 1], strides = [1, 1]} : vector<8x9xf32> to vector<8x1xf32>
    %15 = vector.broadcast %14 : vector<8x1xf32> to vector<8x512xf32>
    %16 = arith.mulf %13, %15 : vector<8x512xf32>
    %17 = arith.addf %12, %16 : vector<8x512xf32>
    %c0_12 = arith.constant 0 : index
    %c2 = arith.constant 2 : index
    %18 = vector.load %arg7[%c0_12, %c2] : memref<8x546xf32, #tpu.memory_space<vmem>>, vector<8x512xf32>
    %19 = vector.extract_strided_slice %9 {offsets = [0, 2], sizes = [8, 1], strides = [1, 1]} : vector<8x9xf32> to vector<8x1xf32>
    %20 = vector.broadcast %19 : vector<8x1xf32> to vector<8x512xf32>
    %21 = arith.mulf %18, %20 : vector<8x512xf32>
    %22 = arith.addf %17, %21 : vector<8x512xf32>
    %c0_13 = arith.constant 0 : index
    %c16 = arith.constant 16 : index
    %23 = vector.load %arg7[%c0_13, %c16] : memref<8x546xf32, #tpu.memory_space<vmem>>, vector<8x512xf32>
    %24 = vector.extract_strided_slice %9 {offsets = [0, 3], sizes = [8, 1], strides = [1, 1]} : vector<8x9xf32> to vector<8x1xf32>
    %25 = vector.broadcast %24 : vector<8x1xf32> to vector<8x512xf32>
    %26 = arith.mulf %23, %25 : vector<8x512xf32>
    %27 = arith.addf %22, %26 : vector<8x512xf32>
    %c0_14 = arith.constant 0 : index
    %c17 = arith.constant 17 : index
    %28 = vector.load %arg7[%c0_14, %c17] : memref<8x546xf32, #tpu.memory_space<vmem>>, vector<8x512xf32>
    %29 = vector.extract_strided_slice %9 {offsets = [0, 4], sizes = [8, 1], strides = [1, 1]} : vector<8x9xf32> to vector<8x1xf32>
    %30 = vector.broadcast %29 : vector<8x1xf32> to vector<8x512xf32>
    %31 = arith.mulf %28, %30 : vector<8x512xf32>
    %32 = arith.addf %27, %31 : vector<8x512xf32>
    %c0_15 = arith.constant 0 : index
    %c18 = arith.constant 18 : index
    %33 = vector.load %arg7[%c0_15, %c18] : memref<8x546xf32, #tpu.memory_space<vmem>>, vector<8x512xf32>
    %34 = vector.extract_strided_slice %9 {offsets = [0, 5], sizes = [8, 1], strides = [1, 1]} : vector<8x9xf32> to vector<8x1xf32>
    %35 = vector.broadcast %34 : vector<8x1xf32> to vector<8x512xf32>
    %36 = arith.mulf %33, %35 : vector<8x512xf32>
    %37 = arith.addf %32, %36 : vector<8x512xf32>
    %c0_16 = arith.constant 0 : index
    %c32 = arith.constant 32 : index
    %38 = vector.load %arg7[%c0_16, %c32] : memref<8x546xf32, #tpu.memory_space<vmem>>, vector<8x512xf32>
    %39 = vector.extract_strided_slice %9 {offsets = [0, 6], sizes = [8, 1], strides = [1, 1]} : vector<8x9xf32> to vector<8x1xf32>
    %40 = vector.broadcast %39 : vector<8x1xf32> to vector<8x512xf32>
    %41 = arith.mulf %38, %40 : vector<8x512xf32>
    %42 = arith.addf %37, %41 : vector<8x512xf32>
    %c0_17 = arith.constant 0 : index
    %c33 = arith.constant 33 : index
    %43 = vector.load %arg7[%c0_17, %c33] : memref<8x546xf32, #tpu.memory_space<vmem>>, vector<8x512xf32>
    %44 = vector.extract_strided_slice %9 {offsets = [0, 7], sizes = [8, 1], strides = [1, 1]} : vector<8x9xf32> to vector<8x1xf32>
    %45 = vector.broadcast %44 : vector<8x1xf32> to vector<8x512xf32>
    %46 = arith.mulf %43, %45 : vector<8x512xf32>
    %47 = arith.addf %42, %46 : vector<8x512xf32>
    %c0_18 = arith.constant 0 : index
    %c34 = arith.constant 34 : index
    %48 = vector.load %arg7[%c0_18, %c34] : memref<8x546xf32, #tpu.memory_space<vmem>>, vector<8x512xf32>
    %49 = vector.extract_strided_slice %9 {offsets = [0, 8], sizes = [8, 1], strides = [1, 1]} : vector<8x9xf32> to vector<8x1xf32>
    %50 = vector.broadcast %49 : vector<8x1xf32> to vector<8x512xf32>
    %51 = arith.mulf %48, %50 : vector<8x512xf32>
    %52 = arith.addf %47, %51 : vector<8x512xf32>
    %c0_19 = arith.constant 0 : index
    %c0_20 = arith.constant 0 : index
    %53 = vector.load %arg5[%c0_19, %c0_20] : memref<8x1xf32, #tpu.memory_space<vmem>>, vector<8x1xf32>
    %54 = vector.broadcast %53 : vector<8x1xf32> to vector<8x512xf32>
    %55 = arith.addf %52, %54 : vector<8x512xf32>
    %c0_21 = arith.constant 0 : index
    %c0_22 = arith.constant 0 : index
    %56 = vector.load %arg6[%c0_21, %c0_22] : memref<8x512xf32, #tpu.memory_space<vmem>>, vector<8x512xf32>
    tpu.vector_store %arg6[%c0_21, %c0_22], %55 {strides = array<i32>} : memref<8x512xf32, #tpu.memory_space<vmem>>, vector<8x512xf32>,
    return
  }
  func.func @transform_0(%arg0: i32) -> (i32, i32) {
    %c0_i32 = arith.constant 0 : i32
    %c0_i32_0 = arith.constant 0 : i32
    %c0_i32_1 = arith.constant 0 : i32
    return %c0_i32, %c0_i32_0 : i32, i32
  }
  func.func @transform_1(%arg0: i32) -> (i32, i32) {
    %c0_i32 = arith.constant 0 : i32
    %c0_i32_0 = arith.constant 0 : i32
    %c0_i32_1 = arith.constant 0 : i32
    return %c0_i32, %c0_i32_0 : i32, i32
  }
  func.func @transform_2(%arg0: i32) -> (i32, i32) {
    %c0_i32 = arith.constant 0 : i32
    %c0_i32_0 = arith.constant 0 : i32
    %c0_i32_1 = arith.constant 0 : i32
    return %c0_i32, %c0_i32_0 : i32, i32
  }
  func.func @transform_3(%arg0: i32) -> (i32, i32) {
    %c0_i32 = arith.constant 0 : i32
    %c0_i32_0 = arith.constant 0 : i32
    %c0_i32_1 = arith.constant 0 : i32
    return %c0_i32, %c0_i32_0 : i32, i32
  }
  func.func @transform_4(%arg0: i32) -> (i32, i32) {
    %c0_i32 = arith.constant 0 : i32
    %c0_i32_0 = arith.constant 0 : i32
    %c0_i32_1 = arith.constant 0 : i32
    return %c0_i32, %c0_i32_0 : i32, i32
  }
  func.func @transform_5(%arg0: i32) -> (i32, i32) {
    %c0_i32 = arith.constant 0 : i32
    %c0_i32_0 = arith.constant 0 : i32
    %c0_i32_1 = arith.constant 0 : i32
    return %c0_i32, %c0_i32_0 : i32, i32
  }
}

</mosaic_0001>

<llo_original>
// kernel: tpu_custom_call.1
$region0: #{tpu_custom_call.1}
  #allocation0 [shape = 'u32[]', space=smem, size = 0x4, offset = 0x4, fixed_abs, tag = 'smem constant byte address 0x4 - core index']
  #allocation1 [shape = 'u32[72,128]{1,0:T(1,128)}', space=vmem, size = 0x9000, scoped, tag = 'internal scratch']
  #allocation2 [shape = 'f32[8,546]{1,0:T(8,128)}', space=vmem, size = 0x5000, scoped, tag = 'scratch operand']
  %s0 = inlined_call_operand.vmem [shape: f32[4,512], index: 0, kind: input, shape index: {}]
  %s1 = inlined_call_operand.vmem [shape: f32[8,4], index: 1, kind: input, shape index: {}]
  %s2 = inlined_call_operand.vmem [shape: f32[8,1], index: 2, kind: input, shape index: {}]
  %s3 = inlined_call_operand.vmem [shape: f32[8,9], index: 3, kind: input, shape index: {}]
  %s4 = inlined_call_operand.vmem [shape: f32[8,1], index: 4, kind: input, shape index: {}]
  %s5 = inlined_call_operand.hbm [shape: f32[8,512], index: 5, kind: output, shape index: {}]
  %s6 = sld [smem:[#allocation0]]
  $region30: #{tpu_custom_call.1} parent=0
    _
  %s8 = ssub.s32 1, %s6
  %s9 = scalar_select 0, %s8, %s6
  $region1: #{tpu_custom_call.1} parent=0
    #allocation3 [shape = 'u8[16384]{0}', space=vmem, size = 0x4000, scoped, tag = 'output window, operand 0, single buffered']
    #allocation4 [shape = 's32[1]{0}', space=sflag, size = 0x4, scoped, tag = 'scoped memory for tpu_custom_call.1']
    %10 = vsyncpa [#allocation4], 0
    // Predicated region
    $region2: #{tpu_custom_call.1} parent=1 // pred_check
      _
    $region3: #{tpu_custom_call.1} parent=1 // pred_check_branch
      %12 = sbr.rel (0) target = $region5
    $region4: #{tpu_custom_call.1} parent=1 // pred_region
      _
    $region5: #{tpu_custom_call.1} parent=1 // pred_fallthru
      _
    // Predicated region
    $region6: #{tpu_custom_call.1} parent=1 // pred_check
      _
    $region7: #{tpu_custom_call.1} parent=1 // pred_check_branch
      %14 = sbr.rel (0) target = $region9
    $region8: #{tpu_custom_call.1} parent=1 // pred_region
      _
    $region9: #{tpu_custom_call.1} parent=1 // pred_fallthru
      _
    // Predicated region
    $region10: #{tpu_custom_call.1} parent=1 // pred_check
      _
    $region11: #{tpu_custom_call.1} parent=1 // pred_check_branch
      %16 = sbr.rel (0) target = $region13
    $region12: #{tpu_custom_call.1} parent=1 // pred_region
      _
    $region13: #{tpu_custom_call.1} parent=1 // pred_fallthru
      _
    // Predicated region
    $region14: #{tpu_custom_call.1} parent=1 // pred_check
      _
    $region15: #{tpu_custom_call.1} parent=1 // pred_check_branch
      %18 = sbr.rel (0) target = $region17
    $region16: #{tpu_custom_call.1} parent=1 // pred_region
      _
    $region17: #{tpu_custom_call.1} parent=1 // pred_fallthru
      _
    // Predicated region
    $region18: #{tpu_custom_call.1} parent=1 // pred_check
      _
    $region19: #{tpu_custom_call.1} parent=1 // pred_check_branch
      %20 = sbr.rel (0) target = $region21
    $region20: #{tpu_custom_call.1} parent=1 // pred_region
      _
    $region21: #{tpu_custom_call.1} parent=1 // pred_fallthru
      _
    %v21 = vld [vmem:[%s1] sm:$0xff]
    %v22 = vld [vmem:[%s0] sm:$0xff]
    %v23 = vld [vmem:[%s0 + $0x8] sm:$0xff]
    %v24 = vld [vmem:[%s2] sm:$0xff]
    %26 = vset.pattern.permute.xlu0 0
    %27 = vperm.xlu0 %26, %v24
    %v28 = vpop.permute.xlu0 %27
    %32 = vst [vmem:[#allocation1] ss:$2 sm:$0xff] %v22
    %s33 = scalar_lea.vmem [#allocation1], 16
    %34 = vst [vmem:[%s33] ss:$2 sm:$0xff] %v23
    %v35 = vld.sshfl [vmem:[#allocation1] sm:$0xff pattern:$0x75316420]
    %v36 = vld.sshfl [vmem:[#allocation1 + $0x8] sm:$0xff pattern:$0x75316420]
    %v37 = vld.sshfl [vmem:[#allocation1 + $0x10] sm:$0xff pattern:$0x75316420]
    %v38 = vld.sshfl [vmem:[#allocation1 + $0x18] sm:$0xff pattern:$0x75316420]
    %vm39 = vcmask 31744
    %v41 = vsel %vm39, %v21, 0
    %vm43 = vcmask 1043456
    %v44 = vsel %vm43, %v35, 0
    %v46 = vsel %vm43, %v36, 0
    %v48 = vsel %vm43, %v37, 0
    %v50 = vsel %vm43, %v38, 0
    %52 = vmatpush.msra.mxu0 0.0
    %53 = vmatpush.msra.mxu0 0.0
    %54 = vmatpush.msra.mxu0 0.0
    %55 = vmatpush.msra.mxu0 0.0
    %56 = vmatpush.msra.mxu0 0.0
    %57 = vmatpush.msra.mxu0 0.0
    %58 = vmatpush.msra.mxu0 0.0
    %59 = vmatpush.msra.mxu0 0.0
    %60 = vmatpush.msra.mxu0 0.0
    %61 = vmatpush.msra.mxu0 0.0
    %62 = vmatpush.msra.mxu0 0.0
    %63 = vmatpush.msra.mxu0 0.0
    %64 = vmatpush.msra.mxu0 0.0
    %65 = vmatpush.msra.mxu0 0.0
    %66 = vmatpush.msra.mxu0 0.0
    %67 = vmatpush.msra.mxu0 %v44
    %68 = vmatmul.f32.gmra.mxu0 %v41
    %v69 = vpop.f32.mrf.mxu0
    %v70 = vadd.f32 %v28, %v69
    %71 = vdwg.mxu0
    %72 = vmatpush.msra.mxu0 0.0
    %73 = vmatpush.msra.mxu0 0.0
    %74 = vmatpush.msra.mxu0 0.0
    %75 = vmatpush.msra.mxu0 0.0
    %76 = vmatpush.msra.mxu0 0.0
    %77 = vmatpush.msra.mxu0 0.0
    %78 = vmatpush.msra.mxu0 0.0
    %79 = vmatpush.msra.mxu0 0.0
    %80 = vmatpush.msra.mxu0 0.0
    %81 = vmatpush.msra.mxu0 0.0
    %82 = vmatpush.msra.mxu0 0.0
    %83 = vmatpush.msra.mxu0 0.0
    %84 = vmatpush.msra.mxu0 0.0
    %85 = vmatpush.msra.mxu0 0.0
    %86 = vmatpush.msra.mxu0 0.0
    %87 = vmatpush.msra.mxu0 %v46
    %88 = vmatmul.f32.gmra.mxu0 %v41
    %v89 = vpop.f32.mrf.mxu0
    %v90 = vadd.f32 %v28, %v89
    %91 = vdwg.mxu0
    %92 = vmatpush.msra.mxu0 0.0
    %93 = vmatpush.msra.mxu0 0.0
    %94 = vmatpush.msra.mxu0 0.0
    %95 = vmatpush.msra.mxu0 0.0
    %96 = vmatpush.msra.mxu0 0.0
    %97 = vmatpush.msra.mxu0 0.0
    %98 = vmatpush.msra.mxu0 0.0
    %99 = vmatpush.msra.mxu0 0.0
    %100 = vmatpush.msra.mxu0 0.0
    %101 = vmatpush.msra.mxu0 0.0
    %102 = vmatpush.msra.mxu0 0.0
    %103 = vmatpush.msra.mxu0 0.0
    %104 = vmatpush.msra.mxu0 0.0
    %105 = vmatpush.msra.mxu0 0.0
    %106 = vmatpush.msra.mxu0 0.0
    %107 = vmatpush.msra.mxu0 %v48
    %108 = vmatmul.f32.gmra.mxu0 %v41
    %v109 = vpop.f32.mrf.mxu0
    %v110 = vadd.f32 %v28, %v109
    %111 = vdwg.mxu0
    %112 = vmatpush.msra.mxu0 0.0
    %113 = vmatpush.msra.mxu0 0.0
    %114 = vmatpush.msra.mxu0 0.0
    %115 = vmatpush.msra.mxu0 0.0
    %116 = vmatpush.msra.mxu0 0.0
    %117 = vmatpush.msra.mxu0 0.0
    %118 = vmatpush.msra.mxu0 0.0
    %119 = vmatpush.msra.mxu0 0.0
    %120 = vmatpush.msra.mxu0 0.0
    %121 = vmatpush.msra.mxu0 0.0
    %122 = vmatpush.msra.mxu0 0.0
    %123 = vmatpush.msra.mxu0 0.0
    %124 = vmatpush.msra.mxu0 0.0
    %125 = vmatpush.msra.mxu0 0.0
    %126 = vmatpush.msra.mxu0 0.0
    %127 = vmatpush.msra.mxu0 %v50
    %128 = vmatmul.f32.gmra.mxu0 %v41
    %v129 = vpop.f32.mrf.mxu0
    %v130 = vadd.f32 %v28, %v129
    %131 = vdwg.mxu0
    %132 = vst [vmem:[#allocation2] sm:$0xff] %v70
    %133 = vst [vmem:[#allocation2 + $0x8] sm:$0xff] %v90
    %134 = vst [vmem:[#allocation2 + $0x10] sm:$0xff] %v110
    %135 = vst [vmem:[#allocation2 + $0x18] sm:$0xff] %v130
    %vm136 = vcmask 277504
    %137 = vst.msk [vmem:[#allocation2 + $0x20] sm:$0xff] %vm136, 0.0
    %v138 = vld [vmem:[%s3] sm:$0xff]
    %140 = vset.pattern.permute.xlu0 0
    %141 = vperm.xlu0 %140, %v138
    %v142 = vpop.permute.xlu0 %141
    %v144 = vmul.f32 %v70, %v142
    %v145 = vmul.f32 %v90, %v142
    %v146 = vmul.f32 %v110, %v142
    %v147 = vmul.f32 %v130, %v142
    %v148 = vld [vmem:[#allocation2] sm:$0xff]
    %v149 = vld [vmem:[#allocation2 + $0x8] sm:$0xff]
    %v150 = vld [vmem:[#allocation2 + $0x10] sm:$0xff]
    %v151 = vld [vmem:[#allocation2 + $0x18] sm:$0xff]
    %v152 = vld [vmem:[#allocation2 + $0x20] sm:$0xff]
    %153 = vset.pattern.permute.xlu0 1
    %154 = vperm.xlu0 %153, %v138
    %v155 = vpop.permute.xlu0 %154
    %v157 = vmul.f32 %v148, %v155
    %v158 = vmul.f32 %v149, %v155
    %v159 = vmul.f32 %v150, %v155
    %v160 = vmul.f32 %v151, %v155
    %v161 = vmul.f32 %v152, %v155
    %167 = vrot.lane.b32.xlu0 %v157, 127
    %v168 = vpop.permute.xlu0 %167
    %169 = vrot.lane.b32.xlu0 %v158, 127
    %v170 = vpop.permute.xlu0 %169
    %171 = vrot.lane.b32.xlu0 %v159, 127
    %v172 = vpop.permute.xlu0 %171
    %173 = vrot.lane.b32.xlu0 %v160, 127
    %v174 = vpop.permute.xlu0 %173
    %175 = vrot.lane.b32.xlu0 %v161, 127
    %v176 = vpop.permute.xlu0 %175
    %vm177 = vcmask 1039360
    %v178 = vsel %vm177, %v168, %v170
    %v179 = vsel %vm177, %v170, %v172
    %v180 = vsel %vm177, %v172, %v174
    %v181 = vsel %vm177, %v174, %v176
    %v186 = vadd.f32 %v144, %v178
    %v187 = vadd.f32 %v145, %v179
    %v188 = vadd.f32 %v146, %v180
    %v189 = vadd.f32 %v147, %v181
    %190 = vset.pattern.permute.xlu0 2
    %191 = vperm.xlu0 %190, %v138
    %v192 = vpop.permute.xlu0 %191
    %v194 = vmul.f32 %v148, %v192
    %v195 = vmul.f32 %v149, %v192
    %v196 = vmul.f32 %v150, %v192
    %v197 = vmul.f32 %v151, %v192
    %v198 = vmul.f32 %v152, %v192
    %204 = vrot.lane.b32.xlu0 %v194, 126
    %v205 = vpop.permute.xlu0 %204
    %206 = vrot.lane.b32.xlu0 %v195, 126
    %v207 = vpop.permute.xlu0 %206
    %208 = vrot.lane.b32.xlu0 %v196, 126
    %v209 = vpop.permute.xlu0 %208
    %210 = vrot.lane.b32.xlu0 %v197, 126
    %v211 = vpop.permute.xlu0 %210
    %212 = vrot.lane.b32.xlu0 %v198, 126
    %v213 = vpop.permute.xlu0 %212
    %vm214 = vcmask 1031168
    %v215 = vsel %vm214, %v205, %v207
    %v216 = vsel %vm214, %v207, %v209
    %v217 = vsel %vm214, %v209, %v211
    %v218 = vsel %vm214, %v211, %v213
    %v223 = vadd.f32 %v186, %v215
    %v224 = vadd.f32 %v187, %v216
    %v225 = vadd.f32 %v188, %v217
    %v226 = vadd.f32 %v189, %v218
    %227 = vset.pattern.permute.xlu0 3
    %228 = vperm.xlu0 %227, %v138
    %v229 = vpop.permute.xlu0 %228
    %v231 = vmul.f32 %v148, %v229
    %v232 = vmul.f32 %v149, %v229
    %v233 = vmul.f32 %v150, %v229
    %v234 = vmul.f32 %v151, %v229
    %v235 = vmul.f32 %v152, %v229
    %241 = vrot.lane.b32.xlu0 %v231, 112
    %v242 = vpop.permute.xlu0 %241
    %243 = vrot.lane.b32.xlu0 %v232, 112
    %v244 = vpop.permute.xlu0 %243
    %245 = vrot.lane.b32.xlu0 %v233, 112
    %v246 = vpop.permute.xlu0 %245
    %247 = vrot.lane.b32.xlu0 %v234, 112
    %v248 = vpop.permute.xlu0 %247
    %249 = vrot.lane.b32.xlu0 %v235, 112
    %v250 = vpop.permute.xlu0 %249
    %vm251 = vcmask 916480
    %v252 = vsel %vm251, %v242, %v244
    %v253 = vsel %vm251, %v244, %v246
    %v254 = vsel %vm251, %v246, %v248
    %v255 = vsel %vm251, %v248, %v250
    %v260 = vadd.f32 %v223, %v252
    %v261 = vadd.f32 %v224, %v253
    %v262 = vadd.f32 %v225, %v254
    %v263 = vadd.f32 %v226, %v255
    %264 = vset.pattern.permute.xlu0 4
    %265 = vperm.xlu0 %264, %v138
    %v266 = vpop.permute.xlu0 %265
    %v268 = vmul.f32 %v148, %v266
    %v269 = vmul.f32 %v149, %v266
    %v270 = vmul.f32 %v150, %v266
    %v271 = vmul.f32 %v151, %v266
    %v272 = vmul.f32 %v152, %v266
    %278 = vrot.lane.b32.xlu0 %v268, 111
    %v279 = vpop.permute.xlu0 %278
    %280 = vrot.lane.b32.xlu0 %v269, 111
    %v281 = vpop.permute.xlu0 %280
    %282 = vrot.lane.b32.xlu0 %v270, 111
    %v283 = vpop.permute.xlu0 %282
    %284 = vrot.lane.b32.xlu0 %v271, 111
    %v285 = vpop.permute.xlu0 %284
    %286 = vrot.lane.b32.xlu0 %v272, 111
    %v287 = vpop.permute.xlu0 %286
    %vm288 = vcmask 908288
    %v289 = vsel %vm288, %v279, %v281
    %v290 = vsel %vm288, %v281, %v283
    %v291 = vsel %vm288, %v283, %v285
    %v292 = vsel %vm288, %v285, %v287
    %v297 = vadd.f32 %v260, %v289
    %v298 = vadd.f32 %v261, %v290
    %v299 = vadd.f32 %v262, %v291
    %v300 = vadd.f32 %v263, %v292
    %301 = vset.pattern.permute.xlu0 5
    %302 = vperm.xlu0 %301, %v138
    %v303 = vpop.permute.xlu0 %302
    %v305 = vmul.f32 %v148, %v303
    %v306 = vmul.f32 %v149, %v303
    %v307 = vmul.f32 %v150, %v303
    %v308 = vmul.f32 %v151, %v303
    %v309 = vmul.f32 %v152, %v303
    %315 = vrot.lane.b32.xlu0 %v305, 110
    %v316 = vpop.permute.xlu0 %315
    %317 = vrot.lane.b32.xlu0 %v306, 110
    %v318 = vpop.permute.xlu0 %317
    %319 = vrot.lane.b32.xlu0 %v307, 110
    %v320 = vpop.permute.xlu0 %319
    %321 = vrot.lane.b32.xlu0 %v308, 110
    %v322 = vpop.permute.xlu0 %321
    %323 = vrot.lane.b32.xlu0 %v309, 110
    %v324 = vpop.permute.xlu0 %323
    %vm325 = vcmask 900096
    %v326 = vsel %vm325, %v316, %v318
    %v327 = vsel %vm325, %v318, %v320
    %v328 = vsel %vm325, %v320, %v322
    %v329 = vsel %vm325, %v322, %v324
    %v334 = vadd.f32 %v297, %v326
    %v335 = vadd.f32 %v298, %v327
    %v336 = vadd.f32 %v299, %v328
    %v337 = vadd.f32 %v300, %v329
    %338 = vset.pattern.permute.xlu0 6
    %339 = vperm.xlu0 %338, %v138
    %v340 = vpop.permute.xlu0 %339
    %v342 = vmul.f32 %v148, %v340
    %v343 = vmul.f32 %v149, %v340
    %v344 = vmul.f32 %v150, %v340
    %v345 = vmul.f32 %v151, %v340
    %v346 = vmul.f32 %v152, %v340
    %352 = vrot.lane.b32.xlu0 %v342, 96
    %v353 = vpop.permute.xlu0 %352
    %354 = vrot.lane.b32.xlu0 %v343, 96
    %v355 = vpop.permute.xlu0 %354
    %356 = vrot.lane.b32.xlu0 %v344, 96
    %v357 = vpop.permute.xlu0 %356
    %358 = vrot.lane.b32.xlu0 %v345, 96
    %v359 = vpop.permute.xlu0 %358
    %360 = vrot.lane.b32.xlu0 %v346, 96
    %v361 = vpop.permute.xlu0 %360
    %vm362 = vcmask 785408
    %v363 = vsel %vm362, %v353, %v355
    %v364 = vsel %vm362, %v355, %v357
    %v365 = vsel %vm362, %v357, %v359
    %v366 = vsel %vm362, %v359, %v361
    %v371 = vadd.f32 %v334, %v363
    %v372 = vadd.f32 %v335, %v364
    %v373 = vadd.f32 %v336, %v365
    %v374 = vadd.f32 %v337, %v366
    %375 = vset.pattern.permute.xlu0 7
    %376 = vperm.xlu0 %375, %v138
    %v377 = vpop.permute.xlu0 %376
    %v379 = vmul.f32 %v148, %v377
    %v380 = vmul.f32 %v149, %v377
    %v381 = vmul.f32 %v150, %v377
    %v382 = vmul.f32 %v151, %v377
    %v383 = vmul.f32 %v152, %v377
    %389 = vrot.lane.b32.xlu0 %v379, 95
    %v390 = vpop.permute.xlu0 %389
    %391 = vrot.lane.b32.xlu0 %v380, 95
    %v392 = vpop.permute.xlu0 %391
    %393 = vrot.lane.b32.xlu0 %v381, 95
    %v394 = vpop.permute.xlu0 %393
    %395 = vrot.lane.b32.xlu0 %v382, 95
    %v396 = vpop.permute.xlu0 %395
    %397 = vrot.lane.b32.xlu0 %v383, 95
    %v398 = vpop.permute.xlu0 %397
    %vm399 = vcmask 777216
    %v400 = vsel %vm399, %v390, %v392
    %v401 = vsel %vm399, %v392, %v394
    %v402 = vsel %vm399, %v394, %v396
    %v403 = vsel %vm399, %v396, %v398
    %v408 = vadd.f32 %v371, %v400
    %v409 = vadd.f32 %v372, %v401
    %v410 = vadd.f32 %v373, %v402
    %v411 = vadd.f32 %v374, %v403
    %412 = vset.pattern.permute.xlu0 8
    %413 = vperm.xlu0 %412, %v138
    %v414 = vpop.permute.xlu0 %413
    %v416 = vmul.f32 %v148, %v414
    %v417 = vmul.f32 %v149, %v414
    %v418 = vmul.f32 %v150, %v414
    %v419 = vmul.f32 %v151, %v414
    %v420 = vmul.f32 %v152, %v414
    %426 = vrot.lane.b32.xlu0 %v416, 94
    %v427 = vpop.permute.xlu0 %426
    %428 = vrot.lane.b32.xlu0 %v417, 94
    %v429 = vpop.permute.xlu0 %428
    %430 = vrot.lane.b32.xlu0 %v418, 94
    %v431 = vpop.permute.xlu0 %430
    %432 = vrot.lane.b32.xlu0 %v419, 94
    %v433 = vpop.permute.xlu0 %432
    %434 = vrot.lane.b32.xlu0 %v420, 94
    %v435 = vpop.permute.xlu0 %434
    %vm436 = vcmask 769024
    %v437 = vsel %vm436, %v427, %v429
    %v438 = vsel %vm436, %v429, %v431
    %v439 = vsel %vm436, %v431, %v433
    %v440 = vsel %vm436, %v433, %v435
    %v445 = vadd.f32 %v408, %v437
    %v446 = vadd.f32 %v409, %v438
    %v447 = vadd.f32 %v410, %v439
    %v448 = vadd.f32 %v411, %v440
    %v449 = vld [vmem:[%s4] sm:$0xff]
    %451 = vset.pattern.permute.xlu0 0
    %452 = vperm.xlu0 %451, %v449
    %v453 = vpop.permute.xlu0 %452
    %v455 = vadd.f32 %v445, %v453
    %v456 = vadd.f32 %v446, %v453
    %v457 = vadd.f32 %v447, %v453
    %v458 = vadd.f32 %v448, %v453
    %459 = vst [vmem:[#allocation3] sm:$0xff] %v455
    %460 = vst [vmem:[#allocation3 + $0x8] sm:$0xff] %v456
    %461 = vst [vmem:[#allocation3 + $0x10] sm:$0xff] %v457
    %462 = vst [vmem:[#allocation3 + $0x18] sm:$0xff] %v458
    // Predicated region
    $region22: #{tpu_custom_call.1} parent=1 // pred_check
      _
    $region23: #{tpu_custom_call.1} parent=1 // pred_check_branch
      %464 = sbr.rel (0) target = $region25
    $region24: #{tpu_custom_call.1} parent=1 // pred_region
      %466 = vsyncadd [#allocation4], 0
      %s468 = sshll.u32 [#allocation3], 4
      %s469 = int_to_ptr.vmem [resolvable:$true] %s468
      %s470 = sshll.u32 %s5, 4
      %s471 = int_to_ptr.hbm [resolvable:$true] %s470
      %473 = dma.vmem_to_hbm [thread:$0]  %s469, 512, %s471, [#allocation4]
    $region25: #{tpu_custom_call.1} parent=1 // pred_fallthru
      _
    // Predicated region
    $region26: #{tpu_custom_call.1} parent=1 // pred_check
      _
    $region27: #{tpu_custom_call.1} parent=1 // pred_check_branch
      %475 = sbr.rel (0) target = $region29
    $region28: #{tpu_custom_call.1} parent=1 // pred_region
      %477 = dma.done [#allocation4], 512
    $region29: #{tpu_custom_call.1} parent=1 // pred_fallthru
      _
    %478 = vsyncpa [#allocation4], 1

</llo_original>
